<compile_context>
chip_gen: v6e
topology: v6e:2x2x1
jax: 0.10.0
libtpu: 0.0.40
codegen_flags: <defaults>
</compile_context>

<pallas_src>
import functools

import jax
import jax.numpy as jnp
from jax.experimental import pallas as pl
from jax.experimental.pallas import tpu as pltpu

LANE = 128                      # lane width — feature-like dims pad to this
_FUSED_VMEM_BUDGET = 8 * 1024 * 1024   # conservative: fused path only if it fits


def _round_up(v, m):
    return (v + m - 1) // m * m


def _pad2(arr, rows, cols):
    return jnp.pad(arr, ((0, rows - arr.shape[0]), (0, cols - arr.shape[1])))


# ---------------------------------------------------------------------------
# Fused kernel (whole graph resident in VMEM — small-graph fast path)
# ---------------------------------------------------------------------------
def _fused_kernel(a_ref, x_ref, w1_ref, b1_ref, w2_ref, b2_ref,
                  hid_ref, logit_ref, out_ref, *, num_classes):
    # Layer 1: hid = relu(A @ (X @ W1) + b1)
    xw = jnp.dot(x_ref[...], w1_ref[...], preferred_element_type=jnp.float32)
    h = jnp.dot(a_ref[...], xw.astype(jnp.bfloat16),
                preferred_element_type=jnp.float32) + b1_ref[...]
    hid = jnp.maximum(h, 0.0)                      # f32 VPU
    hid_ref[...] = hid.astype(jnp.bfloat16)
    # dropout(training=False) == identity.
    # Layer 2: z = A @ (hid @ W2) + b2
    hw = jnp.dot(hid.astype(jnp.bfloat16), w2_ref[...],
                 preferred_element_type=jnp.float32)
    z = jnp.dot(a_ref[...], hw.astype(jnp.bfloat16),
                preferred_element_type=jnp.float32) + b2_ref[...]
    logit_ref[...] = z
    # log_softmax over the real classes only (mask padded lanes, f32 math).
    lane = jax.lax.broadcasted_iota(jnp.int32, z.shape, dimension=1)
    zm = jnp.where(lane < num_classes, z, jnp.float32(-1e30))
    m = jnp.max(zm, axis=1, keepdims=True)
    s = zm - m
    lse = jnp.log(jnp.sum(jnp.exp(s), axis=1, keepdims=True))
    out_ref[...] = s - lse


# ---------------------------------------------------------------------------
# Tiled kernels (general path: row tiles x K-chunked contraction)
# ---------------------------------------------------------------------------
def _xform_kernel(x_ref, w_ref, xw_ref):
    """XW = X @ W1 (bf16 in, f32 accumulate, bf16 out)."""
    xw_ref[...] = jnp.dot(x_ref[...], w_ref[...],
                          preferred_element_type=jnp.float32).astype(jnp.bfloat16)


def _agg_relu_xform_kernel(a_ref, xw_ref, b1_ref, w2_ref,
                           hid_ref, hw_ref, acc_ref):
    """acc += A[i,k] @ XW[k]; at k==last: hid = relu(acc+b1), HW = hid @ W2."""
    k = pl.program_id(1)

    @pl.when(k == 0)
    def _():
        acc_ref[...] = jnp.zeros_like(acc_ref)

    acc_ref[...] += jnp.dot(a_ref[...], xw_ref[...],
                            preferred_element_type=jnp.float32)

    @pl.when(k == pl.num_programs(1) - 1)
    def _():
        hid = jnp.maximum(acc_ref[...] + b1_ref[...], 0.0)
        hid_bf = hid.astype(jnp.bfloat16)
        hid_ref[...] = hid_bf
        hw_ref[...] = jnp.dot(hid_bf, w2_ref[...],
                              preferred_element_type=jnp.float32).astype(jnp.bfloat16)


def _agg_logsoftmax_kernel(a_ref, hw_ref, b2_ref, logit_ref, out_ref, acc_ref,
                           *, num_classes):
    """acc += A[i,k] @ HW[k]; at k==last: logits = acc+b2, out = log_softmax."""
    k = pl.program_id(1)

    @pl.when(k == 0)
    def _():
        acc_ref[...] = jnp.zeros_like(acc_ref)

    acc_ref[...] += jnp.dot(a_ref[...], hw_ref[...],
                            preferred_element_type=jnp.float32)

    @pl.when(k == pl.num_programs(1) - 1)
    def _():
        z = acc_ref[...] + b2_ref[...]
        logit_ref[...] = z
        lane = jax.lax.broadcasted_iota(jnp.int32, z.shape, dimension=1)
        zm = jnp.where(lane < num_classes, z, jnp.float32(-1e30))
        m = jnp.max(zm, axis=1, keepdims=True)
        s = zm - m
        lse = jnp.log(jnp.sum(jnp.exp(s), axis=1, keepdims=True))
        out_ref[...] = s - lse


# ---------------------------------------------------------------------------
# Forward
# ---------------------------------------------------------------------------
def gcn_forward(x, edge_index, w1, b1, w2, b2, *,
                force_tiled=False, tm=256, tk=None):
    n, f = x.shape
    h = w1.shape[1]
    c = w2.shape[1]

    # ---- normalized adjacency A_hat = D^-1/2 (A + I) D^-1/2 (glue JAX) ----
    # NOTE: duplicate edges are deduplicated and self-loop weight is exactly 1;
    # PyG's gcn_norm scatter-adds edge weights on multigraphs (see review).
    src, dst = edge_index[0], edge_index[1]
    adj = jnp.zeros((n, n), jnp.float32).at[dst, src].set(1.0)
    adj = jnp.maximum(adj, jnp.eye(n, dtype=jnp.float32))
    d_inv_sqrt = jax.lax.rsqrt(jnp.sum(adj, axis=1))          # deg >= 1
    a_hat = d_inv_sqrt[:, None] * adj * d_inv_sqrt[None, :]

    fp = _round_up(f, LANE)
    hp = _round_up(h, LANE)
    cp = _round_up(c, LANE)

    # ---- choose path ------------------------------------------------------
    np_f = _round_up(n, LANE)
    fused_bytes = (np_f * np_f * 2 + np_f * fp * 2 + fp * hp * 2 + hp * cp * 2
                   + np_f * hp * (2 + 4 + 4) + np_f * cp * (4 + 4 + 4 + 2))
    use_fused = (not force_tiled) and fused_bytes <= _FUSED_VMEM_BUDGET

    if use_fused:
        # ------------------------------------------------------------------
        # Fused single-kernel path: whole (padded) graph is one VMEM block.
        # (Grid is a single step here; on v7x's 2 TCs this leaves one core
        #  idle, acceptable for graphs this small.)
        # ------------------------------------------------------------------
        np_ = np_f
        a_p = _pad2(a_hat, np_, np_).astype(jnp.bfloat16)
        x_p = _pad2(x, np_, fp).astype(jnp.bfloat16)
        w1_p = _pad2(w1, fp, hp).astype(jnp.bfloat16)
        w2_p = _pad2(w2, hp, cp).astype(jnp.bfloat16)
        b1_p = _pad2(b1.reshape(1, -1), 1, hp).astype(jnp.float32)
        b2_p = _pad2(b2.reshape(1, -1), 1, cp).astype(jnp.float32)

        flops = (2 * np_ * fp * hp + 2 * np_ * np_ * hp
                 + 2 * np_ * hp * cp + 2 * np_ * np_ * cp)
        bytes_accessed = (np_ * np_ * 2 + np_ * fp * 2 + fp * hp * 2
                          + hp * cp * 2 + np_ * hp * 2 + np_ * cp * 8)
        ce = pl.CostEstimate(flops=flops, transcendentals=np_ * cp,
                             bytes_accessed=bytes_accessed)

        hid_p, logits_p, out_p = pl.pallas_call(
            functools.partial(_fused_kernel, num_classes=c),
            out_shape=(jax.ShapeDtypeStruct((np_, hp), jnp.bfloat16),
                       jax.ShapeDtypeStruct((np_, cp), jnp.float32),
                       jax.ShapeDtypeStruct((np_, cp), jnp.float32)),
            compiler_params=pltpu.CompilerParams(
                vmem_limit_bytes=32 * 1024 * 1024),
            cost_estimate=ce,
        )(a_p, x_p, w1_p, b1_p, w2_p, b2_p)

    else:
        # ------------------------------------------------------------------
        # Tiled path: (row tiles) x (K chunks of the N-long contraction).
        # ------------------------------------------------------------------
        tm = max(128, _round_up(tm, 128))
        np_ = _round_up(n, tm)
        if tk is None:
            tk = 2048
            while np_ % tk:
                tk //= 2
        assert np_ % tm == 0 and np_ % tk == 0, "tile sizes must divide padded N"

        a_p = _pad2(a_hat, np_, np_).astype(jnp.bfloat16)
        x_p = _pad2(x, np_, fp).astype(jnp.bfloat16)
        w1_p = _pad2(w1, fp, hp).astype(jnp.bfloat16)
        w2_p = _pad2(w2, hp, cp).astype(jnp.bfloat16)
        b1_p = _pad2(b1.reshape(1, -1), 1, hp).astype(jnp.float32)
        b2_p = _pad2(b2.reshape(1, -1), 1, cp).astype(jnp.float32)

        rows = np_ // tm
        kt = np_ // tk
        params_1d = pltpu.CompilerParams(
            dimension_semantics=("parallel",),
            vmem_limit_bytes=32 * 1024 * 1024)
        params_2d = pltpu.CompilerParams(
            dimension_semantics=("parallel", "arbitrary"),
            vmem_limit_bytes=32 * 1024 * 1024)

        # ---- stage 1: XW = X @ W1 ----------------------------------------
        ce1 = pl.CostEstimate(
            flops=2 * np_ * fp * hp, transcendentals=0,
            bytes_accessed=np_ * fp * 2 + fp * hp * 2 + np_ * hp * 2)
        xw = pl.pallas_call(
            _xform_kernel,
            out_shape=jax.ShapeDtypeStruct((np_, hp), jnp.bfloat16),
            grid=(rows,),
            in_specs=[pl.BlockSpec((tm, fp), lambda i: (i, 0)),
                      pl.BlockSpec((fp, hp), lambda i: (0, 0))],
            out_specs=pl.BlockSpec((tm, hp), lambda i: (i, 0)),
            compiler_params=params_1d,
            cost_estimate=ce1,
        )(x_p, w1_p)

        # ---- stage 2: hid = relu(A@XW + b1); HW = hid @ W2 -----------------
        ce2 = pl.CostEstimate(
            flops=2 * np_ * np_ * hp + 2 * np_ * hp * cp, transcendentals=0,
            bytes_accessed=(np_ * np_ * 2 + rows * np_ * hp * 2
                            + np_ * hp * 2 + np_ * cp * 2))
        hid_p, hw = pl.pallas_call(
            _agg_relu_xform_kernel,
            out_shape=(jax.ShapeDtypeStruct((np_, hp), jnp.bfloat16),
                       jax.ShapeDtypeStruct((np_, cp), jnp.bfloat16)),
            grid=(rows, kt),
            in_specs=[pl.BlockSpec((tm, tk), lambda i, k: (i, k)),
                      pl.BlockSpec((tk, hp), lambda i, k: (k, 0)),
                      pl.BlockSpec((1, hp), lambda i, k: (0, 0)),
                      pl.BlockSpec((hp, cp), lambda i, k: (0, 0))],
            out_specs=(pl.BlockSpec((tm, hp), lambda i, k: (i, 0)),
                       pl.BlockSpec((tm, cp), lambda i, k: (i, 0))),
            scratch_shapes=[pltpu.VMEM((tm, hp), jnp.float32)],
            compiler_params=params_2d,
            cost_estimate=ce2,
        )(a_p, xw, b1_p, w2_p)

        # ---- stage 3: logits = A@HW + b2; out = log_softmax ---------------
        ce3 = pl.CostEstimate(
            flops=2 * np_ * np_ * cp, transcendentals=np_ * cp,
            bytes_accessed=(np_ * np_ * 2 + rows * np_ * cp * 2 + np_ * cp * 8))
        logits_p, out_p = pl.pallas_call(
            functools.partial(_agg_logsoftmax_kernel, num_classes=c),
            out_shape=(jax.ShapeDtypeStruct((np_, cp), jnp.float32),
                       jax.ShapeDtypeStruct((np_, cp), jnp.float32)),
            grid=(rows, kt),
            in_specs=[pl.BlockSpec((tm, tk), lambda i, k: (i, k)),
                      pl.BlockSpec((tk, cp), lambda i, k: (k, 0)),
                      pl.BlockSpec((1, cp), lambda i, k: (0, 0))],
            out_specs=(pl.BlockSpec((tm, cp), lambda i, k: (i, 0)),
                       pl.BlockSpec((tm, cp), lambda i, k: (i, 0))),
            scratch_shapes=[pltpu.VMEM((tm, cp), jnp.float32)],
            compiler_params=params_2d,
            cost_estimate=ce3,
        )(a_p, hw, b2_p)

    hid = hid_p[:n, :h].astype(jnp.float32)
    logits = logits_p[:n, :c]
    out = out_p[:n, :c]
    # Mirrors torch: return ((hid_x, x, x), out) with multilabel=False.
    return (hid, logits, logits), out


# ---------------------------------------------------------------------------
# Reference (pure f32 JAX) for correctness checking
# ---------------------------------------------------------------------------
def _gcn_reference(x, edge_index, w1, b1, w2, b2):
    n = x.shape[0]
    src, dst = edge_index[0], edge_index[1]
    adj = jnp.zeros((n, n), jnp.float32).at[dst, src].set(1.0)
    adj = jnp.maximum(adj, jnp.eye(n, dtype=jnp.float32))
    d = jax.lax.rsqrt(jnp.sum(adj, axis=1))
    a_hat = d[:, None] * adj * d[None, :]
    hid = jnp.maximum(a_hat @ (x @ w1) + b1, 0.0)
    z = a_hat @ (hid @ w2) + b2
    return hid, z, jax.nn.log_softmax(z, axis=1)


def _xavier_uniform(key, fan_in, fan_out):
    bound = jnp.sqrt(6.0 / (fan_in + fan_out))
    return jax.random.uniform(key, (fan_in, fan_out), jnp.float32, -bound, bound)


def _check(got, ref):
    hid, logits, out = got
    hid_r, z_r, out_r = ref
    assert jnp.allclose(jnp.sum(jnp.exp(out), axis=1), 1.0, atol=1e-4)
    assert jnp.allclose(hid, hid_r, atol=1e-1, rtol=5e-2)
    assert jnp.allclose(logits, z_r, atol=1e-1, rtol=5e-2)
    assert jnp.allclose(out, out_r, atol=1e-1, rtol=5e-2)


if __name__ == "__main__":
    key = jax.random.PRNGKey(0)

    # ---- test 1: shipped config (N=32) -> fused single-kernel path --------
    num_nodes, num_features, hid_dim, num_classes = 32, 16, 32, 8
    kx, ke, kw1, kw2, key = jax.random.split(key, 5)
    x = jax.random.normal(kx, (num_nodes, num_features), jnp.float32)
    edge_index = jax.random.randint(ke, (2, 64), 0, num_nodes, jnp.int32)
    w1 = _xavier_uniform(kw1, num_features, hid_dim)
    b1 = jnp.zeros((hid_dim,), jnp.float32)
    w2 = _xavier_uniform(kw2, hid_dim, num_classes)
    b2 = jnp.zeros((num_classes,), jnp.float32)

    (hid_x, logits, logits2), out = jax.jit(gcn_forward)(
        x, edge_index, w1, b1, w2, b2)
    jax.block_until_ready(out)
    assert hid_x.shape == (num_nodes, hid_dim)
    assert logits.shape == (num_nodes, num_classes)
    assert out.shape == (num_nodes, num_classes)
    _check((hid_x, logits, out), _gcn_reference(x, edge_index, w1, b1, w2, b2))

    # ---- test 2: forced tiled path (multi row-tile, K-chunked aggregation) -
    n2, f2, h2, c2 = 300, 48, 32, 8
    kx2, ke2, kw3, kw4, key = jax.random.split(key, 5)
    x2 = jax.random.normal(kx2, (n2, f2), jnp.float32)
    edge_index2 = jax.random.randint(ke2, (2, 600), 0, n2, jnp.int32)
    w1b = _xavier_uniform(kw3, f2, h2)
    b1b = jnp.zeros((h2,), jnp.float32)
    w2b = _xavier_uniform(kw4, h2, c2)
    b2b = jnp.zeros((c2,), jnp.float32)

    tiled_fwd = jax.jit(functools.partial(gcn_forward,
                                          force_tiled=True, tm=256, tk=256))
    (hid2, logit2, _), out2 = tiled_fwd(x2, edge_index2, w1b, b1b, w2b, b2b)
    jax.block_until_ready(out2)
    assert hid2.shape == (n2, h2) and out2.shape == (n2, c2)
    _check((hid2, logit2, out2),
           _gcn_reference(x2, edge_index2, w1b, b1b, w2b, b2b))

    print("KERNEL_OK")
</pallas_src>

<mosaic_0001>
module attributes {stable_mosaic.version = 11 : i64} {
  func.func @_fused_kernel(%arg0: memref<128x128xbf16, #tpu.memory_space<vmem>>, %arg1: memref<128x128xbf16, #tpu.memory_space<vmem>>, %arg2: memref<128x128xbf16, #tpu.memory_space<vmem>>, %arg3: memref<1x128xf32, #tpu.memory_space<vmem>>, %arg4: memref<128x128xbf16, #tpu.memory_space<vmem>>, %arg5: memref<1x128xf32, #tpu.memory_space<vmem>>, %arg6: memref<128x128xbf16, #tpu.memory_space<vmem>>, %arg7: memref<128x128xf32, #tpu.memory_space<vmem>>, %arg8: memref<128x128xf32, #tpu.memory_space<vmem>>) attributes {dimension_semantics = [], scalar_prefetch = 0 : i64, scratch_operands = 0 : i64, tpu.core_type = #tpu.core_type<tc>} {
    %c0 = arith.constant 0 : index
    %c0_0 = arith.constant 0 : index
    %0 = vector.load %arg1[%c0, %c0_0] : memref<128x128xbf16, #tpu.memory_space<vmem>>, vector<128x128xbf16>
    %c0_1 = arith.constant 0 : index
    %c0_2 = arith.constant 0 : index
    %1 = vector.load %arg2[%c0_1, %c0_2] : memref<128x128xbf16, #tpu.memory_space<vmem>>, vector<128x128xbf16>
    %cst = arith.constant dense<0.000000e+00> : vector<128x128xf32>
    %2 = tpu.matmul %0, %1, %cst {dimension_numbers = #tpu.dot_dimension_numbers<[1], [0], [0], [1], [0, 0, 1, 1], [], []>} : vector<128x128xbf16>, vector<128x128xbf16>, vector<128x128xf32> -> vector<128x128xf32>
    %c0_3 = arith.constant 0 : index
    %c0_4 = arith.constant 0 : index
    %3 = vector.load %arg0[%c0_3, %c0_4] : memref<128x128xbf16, #tpu.memory_space<vmem>>, vector<128x128xbf16>
    %4 = arith.truncf %2 : vector<128x128xf32> to vector<128x128xbf16>
    %cst_5 = arith.constant dense<0.000000e+00> : vector<128x128xf32>
    %5 = tpu.matmul %3, %4, %cst_5 {dimension_numbers = #tpu.dot_dimension_numbers<[1], [0], [0], [1], [0, 0, 1, 1], [], []>} : vector<128x128xbf16>, vector<128x128xbf16>, vector<128x128xf32> -> vector<128x128xf32>
    %c0_6 = arith.constant 0 : index
    %c0_7 = arith.constant 0 : index
    %6 = vector.load %arg3[%c0_6, %c0_7] : memref<1x128xf32, #tpu.memory_space<vmem>>, vector<1x128xf32>
    %7 = vector.broadcast %6 : vector<1x128xf32> to vector<128x128xf32>
    %8 = arith.addf %5, %7 : vector<128x128xf32>
    %cst_8 = arith.constant 0.000000e+00 : f32
    %9 = vector.broadcast %cst_8 : f32 to vector<128x128xf32>
    %10 = arith.maximumf %8, %9 : vector<128x128xf32>
    %11 = arith.truncf %10 : vector<128x128xf32> to vector<128x128xbf16>
    %c0_9 = arith.constant 0 : index
    %c0_10 = arith.constant 0 : index
    %12 = vector.load %arg6[%c0_9, %c0_10] : memref<128x128xbf16, #tpu.memory_space<vmem>>, vector<128x128xbf16>
    tpu.vector_store %arg6[%c0_9, %c0_10], %11 {strides = array<i32>} : memref<128x128xbf16, #tpu.memory_space<vmem>>, vector<128x128xbf16>,
    %13 = arith.truncf %10 : vector<128x128xf32> to vector<128x128xbf16>
    %c0_11 = arith.constant 0 : index
    %c0_12 = arith.constant 0 : index
    %14 = vector.load %arg4[%c0_11, %c0_12] : memref<128x128xbf16, #tpu.memory_space<vmem>>, vector<128x128xbf16>
    %cst_13 = arith.constant dense<0.000000e+00> : vector<128x128xf32>
    %15 = tpu.matmul %13, %14, %cst_13 {dimension_numbers = #tpu.dot_dimension_numbers<[1], [0], [0], [1], [0, 0, 1, 1], [], []>} : vector<128x128xbf16>, vector<128x128xbf16>, vector<128x128xf32> -> vector<128x128xf32>
    %c0_14 = arith.constant 0 : index
    %c0_15 = arith.constant 0 : index
    %16 = vector.load %arg0[%c0_14, %c0_15] : memref<128x128xbf16, #tpu.memory_space<vmem>>, vector<128x128xbf16>
    %17 = arith.truncf %15 : vector<128x128xf32> to vector<128x128xbf16>
    %cst_16 = arith.constant dense<0.000000e+00> : vector<128x128xf32>
    %18 = tpu.matmul %16, %17, %cst_16 {dimension_numbers = #tpu.dot_dimension_numbers<[1], [0], [0], [1], [0, 0, 1, 1], [], []>} : vector<128x128xbf16>, vector<128x128xbf16>, vector<128x128xf32> -> vector<128x128xf32>
    %c0_17 = arith.constant 0 : index
    %c0_18 = arith.constant 0 : index
    %19 = vector.load %arg5[%c0_17, %c0_18] : memref<1x128xf32, #tpu.memory_space<vmem>>, vector<1x128xf32>
    %20 = vector.broadcast %19 : vector<1x128xf32> to vector<128x128xf32>
    %21 = arith.addf %18, %20 : vector<128x128xf32>
    %c0_19 = arith.constant 0 : index
    %c0_20 = arith.constant 0 : index
    %22 = vector.load %arg7[%c0_19, %c0_20] : memref<128x128xf32, #tpu.memory_space<vmem>>, vector<128x128xf32>
    tpu.vector_store %arg7[%c0_19, %c0_20], %21 {strides = array<i32>} : memref<128x128xf32, #tpu.memory_space<vmem>>, vector<128x128xf32>,
    %23 = tpu.iota {dimensions = array<i32: 1>} : vector<128x128xi32>
    %c8_i32 = arith.constant 8 : i32
    %24 = vector.broadcast %c8_i32 : i32 to vector<128x128xi32>
    %25 = arith.cmpi slt, %23, %24 : vector<128x128xi32>
    %cst_21 = arith.constant -1.000000e+30 : f32
    %26 = vector.broadcast %cst_21 : f32 to vector<128x128xf32>
    %27 = arith.select %25, %21, %26 : vector<128x128xi1>, vector<128x128xf32>
    %cst_22 = arith.constant dense<0xFF800000> : vector<128xf32>
    %28 = vector.multi_reduction <maximumf>, %27, %cst_22 [1] : vector<128x128xf32> to vector<128xf32>
    %29 = vector.shape_cast %28 : vector<128xf32> to vector<128x1xf32>
    %30 = vector.broadcast %29 : vector<128x1xf32> to vector<128x128xf32>
    %31 = arith.subf %27, %30 : vector<128x128xf32>
    %32 = math.exp %31 : vector<128x128xf32>
    %cst_23 = arith.constant dense<0.000000e+00> : vector<128xf32>
    %33 = vector.multi_reduction <add>, %32, %cst_23 [1] : vector<128x128xf32> to vector<128xf32>
    %34 = vector.shape_cast %33 : vector<128xf32> to vector<128x1xf32>
    %35 = math.log %34 : vector<128x1xf32>
    %36 = vector.broadcast %35 : vector<128x1xf32> to vector<128x128xf32>
    %37 = arith.subf %31, %36 : vector<128x128xf32>
    %c0_24 = arith.constant 0 : index
    %c0_25 = arith.constant 0 : index
    %38 = vector.load %arg8[%c0_24, %c0_25] : memref<128x128xf32, #tpu.memory_space<vmem>>, vector<128x128xf32>
    tpu.vector_store %arg8[%c0_24, %c0_25], %37 {strides = array<i32>} : memref<128x128xf32, #tpu.memory_space<vmem>>, vector<128x128xf32>,
    return
  }
}

</mosaic_0001>

<llo_original>
// kernel: gcn_forward.1
$region0: #{gcn_forward.1}
  #allocation0 [shape = 'u32[]', space=smem, size = 0x4, offset = 0x4, fixed_abs, tag = 'smem constant byte address 0x4 - core index']
  #allocation1 [shape = 'u32[144,128]{1,0:T(1,128)}', space=vmem, size = 0x12000, scoped, tag = 'internal scratch']
  %s0 = inlined_call_operand.vmem [shape: bf16[128,128], index: 0, kind: input, shape index: {}]
  %s1 = inlined_call_operand.vmem [shape: bf16[128,128], index: 1, kind: input, shape index: {}]
  %s2 = inlined_call_operand.vmem [shape: bf16[128,128], index: 2, kind: input, shape index: {}]
  %s3 = inlined_call_operand.vmem [shape: f32[1,128], index: 3, kind: input, shape index: {}]
  %s4 = inlined_call_operand.vmem [shape: bf16[128,128], index: 4, kind: input, shape index: {}]
  %s5 = inlined_call_operand.vmem [shape: f32[1,128], index: 5, kind: input, shape index: {}]
  %s6 = inlined_call_operand.vmem [shape: bf16[128,128], index: 6, kind: output, shape index: {0}]
  %s7 = inlined_call_operand.vmem [shape: f32[128,128], index: 7, kind: output, shape index: {1}]
  %s8 = inlined_call_operand.vmem [shape: f32[128,128], index: 8, kind: output, shape index: {2}]
  %9 = xla_tuple %s6, %s7, %s8
  %s10 = sld [smem:[#allocation0]]
  $region50: #{gcn_forward.1} parent=0
    _
  %s12 = ssub.s32 1, %s10
  %s13 = scalar_select 0, %s12, %s10
  // Predicated region
  $region2: #{gcn_forward.1} parent=0 // pred_check
    _
  $region3: #{gcn_forward.1} parent=0 // pred_check_branch
    %15 = sbr.rel (0) target = $region5
  $region4: #{gcn_forward.1} parent=0 // pred_region
    _
  $region5: #{gcn_forward.1} parent=0 // pred_fallthru
    _
  // Predicated region
  $region6: #{gcn_forward.1} parent=0 // pred_check
    _
  $region7: #{gcn_forward.1} parent=0 // pred_check_branch
    %17 = sbr.rel (0) target = $region9
  $region8: #{gcn_forward.1} parent=0 // pred_region
    _
  $region9: #{gcn_forward.1} parent=0 // pred_fallthru
    _
  // Predicated region
  $region10: #{gcn_forward.1} parent=0 // pred_check
    _
  $region11: #{gcn_forward.1} parent=0 // pred_check_branch
    %19 = sbr.rel (0) target = $region13
  $region12: #{gcn_forward.1} parent=0 // pred_region
    _
  $region13: #{gcn_forward.1} parent=0 // pred_fallthru
    _
  // Predicated region
  $region14: #{gcn_forward.1} parent=0 // pred_check
    _
  $region15: #{gcn_forward.1} parent=0 // pred_check_branch
    %21 = sbr.rel (0) target = $region17
  $region16: #{gcn_forward.1} parent=0 // pred_region
    _
  $region17: #{gcn_forward.1} parent=0 // pred_fallthru
    _
  // Predicated region
  $region18: #{gcn_forward.1} parent=0 // pred_check
    _
  $region19: #{gcn_forward.1} parent=0 // pred_check_branch
    %23 = sbr.rel (0) target = $region21
  $region20: #{gcn_forward.1} parent=0 // pred_region
    _
  $region21: #{gcn_forward.1} parent=0 // pred_fallthru
    _
  // Predicated region
  $region22: #{gcn_forward.1} parent=0 // pred_check
    _
  $region23: #{gcn_forward.1} parent=0 // pred_check_branch
    %25 = sbr.rel (0) target = $region25
  $region24: #{gcn_forward.1} parent=0 // pred_region
    _
  $region25: #{gcn_forward.1} parent=0 // pred_fallthru
    _
  %v27 = vld [vmem:[%s1] sm:$0xf]
  %v28 = vld [vmem:[%s1 + $0x4] sm:$0xf]
  %v29 = vld [vmem:[%s1 + $0x8] sm:$0xf]
  %v30 = vld [vmem:[%s1 + $0xc] sm:$0xf]
  %v31 = vld [vmem:[%s1 + $0x10] sm:$0xf]
  %v32 = vld [vmem:[%s1 + $0x14] sm:$0xf]
  %v33 = vld [vmem:[%s1 + $0x18] sm:$0xf]
  %v34 = vld [vmem:[%s1 + $0x1c] sm:$0xf]
  %v35 = vld [vmem:[%s1 + $0x20] sm:$0xf]
  %v36 = vld [vmem:[%s1 + $0x24] sm:$0xf]
  %v37 = vld [vmem:[%s1 + $0x28] sm:$0xf]
  %v38 = vld [vmem:[%s1 + $0x2c] sm:$0xf]
  %v39 = vld [vmem:[%s1 + $0x30] sm:$0xf]
  %v40 = vld [vmem:[%s1 + $0x34] sm:$0xf]
  %v41 = vld [vmem:[%s1 + $0x38] sm:$0xf]
  %v42 = vld [vmem:[%s1 + $0x3c] sm:$0xf]
  %v43 = vld [vmem:[%s2] sm:$0xf]
  %v44 = vld [vmem:[%s2 + $0x4] sm:$0xf]
  %v45 = vld [vmem:[%s2 + $0x8] sm:$0xf]
  %v46 = vld [vmem:[%s2 + $0xc] sm:$0xf]
  %v47 = vld [vmem:[%s2 + $0x10] sm:$0xf]
  %v48 = vld [vmem:[%s2 + $0x14] sm:$0xf]
  %v49 = vld [vmem:[%s2 + $0x18] sm:$0xf]
  %v50 = vld [vmem:[%s2 + $0x1c] sm:$0xf]
  %v51 = vld [vmem:[%s2 + $0x20] sm:$0xf]
  %v52 = vld [vmem:[%s2 + $0x24] sm:$0xf]
  %v53 = vld [vmem:[%s2 + $0x28] sm:$0xf]
  %v54 = vld [vmem:[%s2 + $0x2c] sm:$0xf]
  %v55 = vld [vmem:[%s2 + $0x30] sm:$0xf]
  %v56 = vld [vmem:[%s2 + $0x34] sm:$0xf]
  %v57 = vld [vmem:[%s2 + $0x38] sm:$0xf]
  %v58 = vld [vmem:[%s2 + $0x3c] sm:$0xf]
  %v75 = vunpack.c.l.b16 %v27
  %v76 = vunpack.c.l.b16 %v28
  %v77 = vunpack.c.l.b16 %v29
  %v78 = vunpack.c.l.b16 %v30
  %v79 = vunpack.c.l.b16 %v31
  %v80 = vunpack.c.l.b16 %v32
  %v81 = vunpack.c.l.b16 %v33
  %v82 = vunpack.c.l.b16 %v34
  %v83 = vunpack.c.l.b16 %v35
  %v84 = vunpack.c.l.b16 %v36
  %v85 = vunpack.c.l.b16 %v37
  %v86 = vunpack.c.l.b16 %v38
  %v87 = vunpack.c.l.b16 %v39
  %v88 = vunpack.c.l.b16 %v40
  %v89 = vunpack.c.l.b16 %v41
  %v90 = vunpack.c.l.b16 %v42
  %v91 = vpack.c.b16 %v76, %v75
  %v92 = vpack.c.b16 %v78, %v77
  %v93 = vpack.c.b16 %v80, %v79
  %v94 = vpack.c.b16 %v82, %v81
  %v95 = vpack.c.b16 %v84, %v83
  %v96 = vpack.c.b16 %v86, %v85
  %v97 = vpack.c.b16 %v88, %v87
  %v98 = vpack.c.b16 %v90, %v89
  %v123 = vunpack.c.l.b16 %v43
  %v124 = vunpack.c.l.b16 %v44
  %v125 = vunpack.c.l.b16 %v45
  %v126 = vunpack.c.l.b16 %v46
  %v127 = vunpack.c.l.b16 %v47
  %v128 = vunpack.c.l.b16 %v48
  %v129 = vunpack.c.l.b16 %v49
  %v130 = vunpack.c.l.b16 %v50
  %v131 = vunpack.c.l.b16 %v51
  %v132 = vunpack.c.l.b16 %v52
  %v133 = vunpack.c.l.b16 %v53
  %v134 = vunpack.c.l.b16 %v54
  %v135 = vunpack.c.l.b16 %v55
  %v136 = vunpack.c.l.b16 %v56
  %v137 = vunpack.c.l.b16 %v57
  %v138 = vunpack.c.l.b16 %v58
  %v139 = vpack.c.b16 %v124, %v123
  %v140 = vpack.c.b16 %v126, %v125
  %v141 = vpack.c.b16 %v128, %v127
  %v142 = vpack.c.b16 %v130, %v129
  %v143 = vpack.c.b16 %v132, %v131
  %v144 = vpack.c.b16 %v134, %v133
  %v145 = vpack.c.b16 %v136, %v135
  %v146 = vpack.c.b16 %v138, %v137
  %155 = vmatprep.subr.bf16.mxu0 0
  %156 = vmatpush1.bf16.msra.mxu0 %v146
  %157 = vmatprep.subr.bf16.mxu0 0
  %158 = vmatpush1.bf16.msra.mxu0 %v145
  %159 = vmatprep.subr.bf16.mxu0 0
  %160 = vmatpush1.bf16.msra.mxu0 %v144
  %161 = vmatprep.subr.bf16.mxu0 0
  %162 = vmatpush1.bf16.msra.mxu0 %v143
  %163 = vmatprep.subr.bf16.mxu0 0
  %164 = vmatpush1.bf16.msra.mxu0 %v142
  %165 = vmatprep.subr.bf16.mxu0 0
  %166 = vmatpush1.bf16.msra.mxu0 %v141
  %167 = vmatprep.subr.bf16.mxu0 0
  %168 = vmatpush1.bf16.msra.mxu0 %v140
  %169 = vmatprep.subr.bf16.mxu0 0
  %170 = vmatpush1.bf16.msra.mxu0 %v139
  %171 = vmatprep.subr.bf16.mxu0 0
  %172 = vmatpush2.bf16.msra.mxu0 0
  %173 = vmatprep.subr.bf16.mxu0 0
  %174 = vmatpush2.bf16.msra.mxu0 0
  %175 = vmatprep.subr.bf16.mxu0 0
  %176 = vmatpush2.bf16.msra.mxu0 0
  %177 = vmatprep.subr.bf16.mxu0 0
  %178 = vmatpush2.bf16.msra.mxu0 0
  %179 = vmatprep.subr.bf16.mxu0 0
  %180 = vmatpush2.bf16.msra.mxu0 0
  %181 = vmatprep.subr.bf16.mxu0 0
  %182 = vmatpush2.bf16.msra.mxu0 0
  %183 = vmatprep.subr.bf16.mxu0 0
  %184 = vmatpush2.bf16.msra.mxu0 0
  %185 = vmatprep.subr.bf16.mxu0 0
  %186 = vmatpush2.bf16.msra.mxu0 0
  %187 = vmatprep.mubr.bf16.mxu0 0
  %188 = vmatmul.mubr.bf16.gmra.mxu0 %v91
  %v189 = vpop.f32.mrf.mxu0
  %v190 = vadd.f32 0.0, %v189
  %v191 = vpop.f32.mrf.mxu0
  %v192 = vpop.f32.mrf.mxu0
  %v193 = vadd.f32 0.0, %v192
  %v194 = vpop.f32.mrf.mxu0
  %195 = vmatprep.mubr.bf16.mxu0 0
  %196 = vmatmul.mubr.bf16.gmra.mxu0 %v92
  %v197 = vpop.f32.mrf.mxu0
  %v198 = vadd.f32 0.0, %v197
  %v199 = vpop.f32.mrf.mxu0
  %v200 = vpop.f32.mrf.mxu0
  %v201 = vadd.f32 0.0, %v200
  %v202 = vpop.f32.mrf.mxu0
  %203 = vmatprep.mubr.bf16.mxu0 0
  %204 = vmatmul.mubr.bf16.gmra.mxu0 %v93
  %v205 = vpop.f32.mrf.mxu0
  %v206 = vadd.f32 0.0, %v205
  %v207 = vpop.f32.mrf.mxu0
  %v208 = vpop.f32.mrf.mxu0
  %v209 = vadd.f32 0.0, %v208
  %v210 = vpop.f32.mrf.mxu0
  %211 = vmatprep.mubr.bf16.mxu0 0
  %212 = vmatmul.mubr.bf16.gmra.mxu0 %v94
  %v213 = vpop.f32.mrf.mxu0
  %v214 = vadd.f32 0.0, %v213
  %v215 = vpop.f32.mrf.mxu0
  %v216 = vpop.f32.mrf.mxu0
  %v217 = vadd.f32 0.0, %v216
  %v218 = vpop.f32.mrf.mxu0
  %219 = vmatprep.mubr.bf16.mxu0 0
  %220 = vmatmul.mubr.bf16.gmra.mxu0 %v95
  %v221 = vpop.f32.mrf.mxu0
  %v222 = vadd.f32 0.0, %v221
  %v223 = vpop.f32.mrf.mxu0
  %v224 = vpop.f32.mrf.mxu0
  %v225 = vadd.f32 0.0, %v224
  %v226 = vpop.f32.mrf.mxu0
  %227 = vmatprep.mubr.bf16.mxu0 0
  %228 = vmatmul.mubr.bf16.gmra.mxu0 %v96
  %v229 = vpop.f32.mrf.mxu0
  %v230 = vadd.f32 0.0, %v229
  %v231 = vpop.f32.mrf.mxu0
  %v232 = vpop.f32.mrf.mxu0
  %v233 = vadd.f32 0.0, %v232
  %v234 = vpop.f32.mrf.mxu0
  %235 = vmatprep.mubr.bf16.mxu0 0
  %236 = vmatmul.mubr.bf16.gmra.mxu0 %v97
  %v237 = vpop.f32.mrf.mxu0
  %v238 = vadd.f32 0.0, %v237
  %v239 = vpop.f32.mrf.mxu0
  %v240 = vpop.f32.mrf.mxu0
  %v241 = vadd.f32 0.0, %v240
  %v242 = vpop.f32.mrf.mxu0
  %243 = vmatprep.mubr.bf16.mxu0 0
  %244 = vmatmul.mubr.bf16.gmra.mxu0 %v98
  %v245 = vpop.f32.mrf.mxu0
  %v246 = vadd.f32 0.0, %v245
  %v247 = vpop.f32.mrf.mxu0
  %v248 = vpop.f32.mrf.mxu0
  %v249 = vadd.f32 0.0, %v248
  %v250 = vpop.f32.mrf.mxu0
  %251 = vdwg.mxu0
  %v252 = vld [vmem:[%s0] sm:$0xf]
  %v253 = vld [vmem:[%s0 + $0x4] sm:$0xf]
  %v254 = vld [vmem:[%s0 + $0x8] sm:$0xf]
  %v255 = vld [vmem:[%s0 + $0xc] sm:$0xf]
  %v256 = vld [vmem:[%s0 + $0x10] sm:$0xf]
  %v257 = vld [vmem:[%s0 + $0x14] sm:$0xf]
  %v258 = vld [vmem:[%s0 + $0x18] sm:$0xf]
  %v259 = vld [vmem:[%s0 + $0x1c] sm:$0xf]
  %v260 = vld [vmem:[%s0 + $0x20] sm:$0xf]
  %v261 = vld [vmem:[%s0 + $0x24] sm:$0xf]
  %v262 = vld [vmem:[%s0 + $0x28] sm:$0xf]
  %v263 = vld [vmem:[%s0 + $0x2c] sm:$0xf]
  %v264 = vld [vmem:[%s0 + $0x30] sm:$0xf]
  %v265 = vld [vmem:[%s0 + $0x34] sm:$0xf]
  %v266 = vld [vmem:[%s0 + $0x38] sm:$0xf]
  %v267 = vld [vmem:[%s0 + $0x3c] sm:$0xf]
  %v268 = vpack.c.bf16 %v193, %v190
  %v269 = vpack.c.bf16 %v201, %v198
  %v270 = vpack.c.bf16 %v209, %v206
  %v271 = vpack.c.bf16 %v217, %v214
  %v272 = vpack.c.bf16 %v225, %v222
  %v273 = vpack.c.bf16 %v233, %v230
  %v274 = vpack.c.bf16 %v241, %v238
  %v275 = vpack.c.bf16 %v249, %v246
  %v276 = vld [vmem:[%s3] sm:$0x1]
  %v278 = vlaneseq
  %v279 = vshrl.u32 %v278, 7
  %v280 = vsub.s32 0, %v279
  %v281 = vrot.slane %v276, %v280
  %v299 = vunpack.c.l.b16 %v252
  %v300 = vunpack.c.l.b16 %v253
  %v301 = vunpack.c.l.b16 %v254
  %v302 = vunpack.c.l.b16 %v255
  %v303 = vunpack.c.l.b16 %v256
  %v304 = vunpack.c.l.b16 %v257
  %v305 = vunpack.c.l.b16 %v258
  %v306 = vunpack.c.l.b16 %v259
  %v307 = vunpack.c.l.b16 %v260
  %v308 = vunpack.c.l.b16 %v261
  %v309 = vunpack.c.l.b16 %v262
  %v310 = vunpack.c.l.b16 %v263
  %v311 = vunpack.c.l.b16 %v264
  %v312 = vunpack.c.l.b16 %v265
  %v313 = vunpack.c.l.b16 %v266
  %v314 = vunpack.c.l.b16 %v267
  %v315 = vpack.c.b16 %v300, %v299
  %v316 = vpack.c.b16 %v302, %v301
  %v317 = vpack.c.b16 %v304, %v303
  %v318 = vpack.c.b16 %v306, %v305
  %v319 = vpack.c.b16 %v308, %v307
  %v320 = vpack.c.b16 %v310, %v309
  %v321 = vpack.c.b16 %v312, %v311
  %v322 = vpack.c.b16 %v314, %v313
  %331 = vmatprep.subr.bf16.mxu0 0
  %332 = vmatpush1.bf16.msra.mxu0 %v275
  %333 = vmatprep.subr.bf16.mxu0 0
  %334 = vmatpush1.bf16.msra.mxu0 %v274
  %335 = vmatprep.subr.bf16.mxu0 0
  %336 = vmatpush1.bf16.msra.mxu0 %v273
  %337 = vmatprep.subr.bf16.mxu0 0
  %338 = vmatpush1.bf16.msra.mxu0 %v272
  %339 = vmatprep.subr.bf16.mxu0 0
  %340 = vmatpush1.bf16.msra.mxu0 %v271
  %341 = vmatprep.subr.bf16.mxu0 0
  %342 = vmatpush1.bf16.msra.mxu0 %v270
  %343 = vmatprep.subr.bf16.mxu0 0
  %344 = vmatpush1.bf16.msra.mxu0 %v269
  %345 = vmatprep.subr.bf16.mxu0 0
  %346 = vmatpush1.bf16.msra.mxu0 %v268
  %347 = vmatprep.subr.bf16.mxu0 0
  %348 = vmatpush2.bf16.msra.mxu0 0
  %349 = vmatprep.subr.bf16.mxu0 0
  %350 = vmatpush2.bf16.msra.mxu0 0
  %351 = vmatprep.subr.bf16.mxu0 0
  %352 = vmatpush2.bf16.msra.mxu0 0
  %353 = vmatprep.subr.bf16.mxu0 0
  %354 = vmatpush2.bf16.msra.mxu0 0
  %355 = vmatprep.subr.bf16.mxu0 0
  %356 = vmatpush2.bf16.msra.mxu0 0
  %357 = vmatprep.subr.bf16.mxu0 0
  %358 = vmatpush2.bf16.msra.mxu0 0
  %359 = vmatprep.subr.bf16.mxu0 0
  %360 = vmatpush2.bf16.msra.mxu0 0
  %361 = vmatprep.subr.bf16.mxu0 0
  %362 = vmatpush2.bf16.msra.mxu0 0
  %363 = vmatprep.mubr.bf16.mxu0 0
  %364 = vmatmul.mubr.bf16.gmra.mxu0 %v315
  %v365 = vpop.f32.mrf.mxu0
  %v366 = vadd.f32 %v281, %v365
  %v367 = vpop.f32.mrf.mxu0
  %v368 = vpop.f32.mrf.mxu0
  %v369 = vadd.f32 %v281, %v368
  %v370 = vpop.f32.mrf.mxu0
  %371 = vmatprep.mubr.bf16.mxu0 0
  %372 = vmatmul.mubr.bf16.gmra.mxu0 %v316
  %v373 = vpop.f32.mrf.mxu0
  %v374 = vadd.f32 %v281, %v373
  %v375 = vpop.f32.mrf.mxu0
  %v376 = vpop.f32.mrf.mxu0
  %v377 = vadd.f32 %v281, %v376
  %v378 = vpop.f32.mrf.mxu0
  %379 = vmatprep.mubr.bf16.mxu0 0
  %380 = vmatmul.mubr.bf16.gmra.mxu0 %v317
  %v381 = vpop.f32.mrf.mxu0
  %v382 = vadd.f32 %v281, %v381
  %v383 = vpop.f32.mrf.mxu0
  %v384 = vpop.f32.mrf.mxu0
  %v385 = vadd.f32 %v281, %v384
  %v386 = vpop.f32.mrf.mxu0
  %387 = vmatprep.mubr.bf16.mxu0 0
  %388 = vmatmul.mubr.bf16.gmra.mxu0 %v318
  %v389 = vpop.f32.mrf.mxu0
  %v390 = vadd.f32 %v281, %v389
  %v391 = vpop.f32.mrf.mxu0
  %v392 = vpop.f32.mrf.mxu0
  %v393 = vadd.f32 %v281, %v392
  %v394 = vpop.f32.mrf.mxu0
  %395 = vmatprep.mubr.bf16.mxu0 0
  %396 = vmatmul.mubr.bf16.gmra.mxu0 %v319
  %v397 = vpop.f32.mrf.mxu0
  %v398 = vadd.f32 %v281, %v397
  %v399 = vpop.f32.mrf.mxu0
  %v400 = vpop.f32.mrf.mxu0
  %v401 = vadd.f32 %v281, %v400
  %v402 = vpop.f32.mrf.mxu0
  %403 = vmatprep.mubr.bf16.mxu0 0
  %404 = vmatmul.mubr.bf16.gmra.mxu0 %v320
  %v405 = vpop.f32.mrf.mxu0
  %v406 = vadd.f32 %v281, %v405
  %v407 = vpop.f32.mrf.mxu0
  %v408 = vpop.f32.mrf.mxu0
  %v409 = vadd.f32 %v281, %v408
  %v410 = vpop.f32.mrf.mxu0
  %411 = vmatprep.mubr.bf16.mxu0 0
  %412 = vmatmul.mubr.bf16.gmra.mxu0 %v321
  %v413 = vpop.f32.mrf.mxu0
  %v414 = vadd.f32 %v281, %v413
  %v415 = vpop.f32.mrf.mxu0
  %v416 = vpop.f32.mrf.mxu0
  %v417 = vadd.f32 %v281, %v416
  %v418 = vpop.f32.mrf.mxu0
  %419 = vmatprep.mubr.bf16.mxu0 0
  %420 = vmatmul.mubr.bf16.gmra.mxu0 %v322
  %v421 = vpop.f32.mrf.mxu0
  %v422 = vadd.f32 %v281, %v421
  %v423 = vpop.f32.mrf.mxu0
  %v424 = vpop.f32.mrf.mxu0
  %v425 = vadd.f32 %v281, %v424
  %v426 = vpop.f32.mrf.mxu0
  %427 = vdwg.mxu0
  %v428 = vmax.f32 %v366, 0.0
  %v429 = vmax.f32 %v369, 0.0
  %v430 = vmax.f32 %v374, 0.0
  %v431 = vmax.f32 %v377, 0.0
  %v432 = vmax.f32 %v382, 0.0
  %v433 = vmax.f32 %v385, 0.0
  %v434 = vmax.f32 %v390, 0.0
  %v435 = vmax.f32 %v393, 0.0
  %v436 = vmax.f32 %v398, 0.0
  %v437 = vmax.f32 %v401, 0.0
  %v438 = vmax.f32 %v406, 0.0
  %v439 = vmax.f32 %v409, 0.0
  %v440 = vmax.f32 %v414, 0.0
  %v441 = vmax.f32 %v417, 0.0
  %v442 = vmax.f32 %v422, 0.0
  %v443 = vmax.f32 %v425, 0.0
  %v444 = vpack.c.bf16 %v429, %v428
  %v445 = vpack.c.bf16 %v431, %v430
  %v446 = vpack.c.bf16 %v433, %v432
  %v447 = vpack.c.bf16 %v435, %v434
  %v448 = vpack.c.bf16 %v437, %v436
  %v449 = vpack.c.bf16 %v439, %v438
  %v450 = vpack.c.bf16 %v441, %v440
  %v451 = vpack.c.bf16 %v443, %v442
  %v460 = vunpack.c.l.b16 %v444
  %v461 = vunpack.c.h.b16 %v444
  %v462 = vunpack.c.l.b16 %v445
  %v463 = vunpack.c.h.b16 %v445
  %v464 = vunpack.c.l.b16 %v446
  %v465 = vunpack.c.h.b16 %v446
  %v466 = vunpack.c.l.b16 %v447
  %v467 = vunpack.c.h.b16 %v447
  %v468 = vunpack.c.l.b16 %v448
  %v469 = vunpack.c.h.b16 %v448
  %v470 = vunpack.c.l.b16 %v449
  %v471 = vunpack.c.h.b16 %v449
  %v472 = vunpack.c.l.b16 %v450
  %v473 = vunpack.c.h.b16 %v450
  %v474 = vunpack.c.l.b16 %v451
  %v475 = vunpack.c.h.b16 %v451
  %v476 = vpack.c.b16 %v460, %v460
  %v477 = vpack.c.b16 %v461, %v461
  %v478 = vpack.c.b16 %v462, %v462
  %v479 = vpack.c.b16 %v463, %v463
  %v480 = vpack.c.b16 %v464, %v464
  %v481 = vpack.c.b16 %v465, %v465
  %v482 = vpack.c.b16 %v466, %v466
  %v483 = vpack.c.b16 %v467, %v467
  %v484 = vpack.c.b16 %v468, %v468
  %v485 = vpack.c.b16 %v469, %v469
  %v486 = vpack.c.b16 %v470, %v470
  %v487 = vpack.c.b16 %v471, %v471
  %v488 = vpack.c.b16 %v472, %v472
  %v489 = vpack.c.b16 %v473, %v473
  %v490 = vpack.c.b16 %v474, %v474
  %v491 = vpack.c.b16 %v475, %v475
  %508 = vst [vmem:[%s6] sm:$0xf] %v476
  %509 = vst [vmem:[%s6 + $0x4] sm:$0xf] %v477
  %510 = vst [vmem:[%s6 + $0x8] sm:$0xf] %v478
  %511 = vst [vmem:[%s6 + $0xc] sm:$0xf] %v479
  %512 = vst [vmem:[%s6 + $0x10] sm:$0xf] %v480
  %513 = vst [vmem:[%s6 + $0x14] sm:$0xf] %v481
  %514 = vst [vmem:[%s6 + $0x18] sm:$0xf] %v482
  %515 = vst [vmem:[%s6 + $0x1c] sm:$0xf] %v483
  %516 = vst [vmem:[%s6 + $0x20] sm:$0xf] %v484
  %517 = vst [vmem:[%s6 + $0x24] sm:$0xf] %v485
  %518 = vst [vmem:[%s6 + $0x28] sm:$0xf] %v486
  %519 = vst [vmem:[%s6 + $0x2c] sm:$0xf] %v487
  %520 = vst [vmem:[%s6 + $0x30] sm:$0xf] %v488
  %521 = vst [vmem:[%s6 + $0x34] sm:$0xf] %v489
  %522 = vst [vmem:[%s6 + $0x38] sm:$0xf] %v490
  %523 = vst [vmem:[%s6 + $0x3c] sm:$0xf] %v491
  %v524 = vld [vmem:[%s4] sm:$0xf]
  %v525 = vld [vmem:[%s4 + $0x4] sm:$0xf]
  %v526 = vld [vmem:[%s4 + $0x8] sm:$0xf]
  %v527 = vld [vmem:[%s4 + $0xc] sm:$0xf]
  %v528 = vld [vmem:[%s4 + $0x10] sm:$0xf]
  %v529 = vld [vmem:[%s4 + $0x14] sm:$0xf]
  %v530 = vld [vmem:[%s4 + $0x18] sm:$0xf]
  %v531 = vld [vmem:[%s4 + $0x1c] sm:$0xf]
  %v532 = vld [vmem:[%s4 + $0x20] sm:$0xf]
  %v533 = vld [vmem:[%s4 + $0x24] sm:$0xf]
  %v534 = vld [vmem:[%s4 + $0x28] sm:$0xf]
  %v535 = vld [vmem:[%s4 + $0x2c] sm:$0xf]
  %v536 = vld [vmem:[%s4 + $0x30] sm:$0xf]
  %v537 = vld [vmem:[%s4 + $0x34] sm:$0xf]
  %v538 = vld [vmem:[%s4 + $0x38] sm:$0xf]
  %v539 = vld [vmem:[%s4 + $0x3c] sm:$0xf]
  %v556 = vunpack.c.l.b16 %v524
  %v557 = vunpack.c.l.b16 %v525
  %v558 = vunpack.c.l.b16 %v526
  %v559 = vunpack.c.l.b16 %v527
  %v560 = vunpack.c.l.b16 %v528
  %v561 = vunpack.c.l.b16 %v529
  %v562 = vunpack.c.l.b16 %v530
  %v563 = vunpack.c.l.b16 %v531
  %v564 = vunpack.c.l.b16 %v532
  %v565 = vunpack.c.l.b16 %v533
  %v566 = vunpack.c.l.b16 %v534
  %v567 = vunpack.c.l.b16 %v535
  %v568 = vunpack.c.l.b16 %v536
  %v569 = vunpack.c.l.b16 %v537
  %v570 = vunpack.c.l.b16 %v538
  %v571 = vunpack.c.l.b16 %v539
  %v572 = vpack.c.b16 %v557, %v556
  %v573 = vpack.c.b16 %v559, %v558
  %v574 = vpack.c.b16 %v561, %v560
  %v575 = vpack.c.b16 %v563, %v562
  %v576 = vpack.c.b16 %v565, %v564
  %v577 = vpack.c.b16 %v567, %v566
  %v578 = vpack.c.b16 %v569, %v568
  %v579 = vpack.c.b16 %v571, %v570
  %588 = vmatprep.subr.bf16.mxu0 0
  %589 = vmatpush1.bf16.msra.mxu0 %v579
  %590 = vmatprep.subr.bf16.mxu0 0
  %591 = vmatpush1.bf16.msra.mxu0 %v578
  %592 = vmatprep.subr.bf16.mxu0 0
  %593 = vmatpush1.bf16.msra.mxu0 %v577
  %594 = vmatprep.subr.bf16.mxu0 0
  %595 = vmatpush1.bf16.msra.mxu0 %v576
  %596 = vmatprep.subr.bf16.mxu0 0
  %597 = vmatpush1.bf16.msra.mxu0 %v575
  %598 = vmatprep.subr.bf16.mxu0 0
  %599 = vmatpush1.bf16.msra.mxu0 %v574
  %600 = vmatprep.subr.bf16.mxu0 0
  %601 = vmatpush1.bf16.msra.mxu0 %v573
  %602 = vmatprep.subr.bf16.mxu0 0
  %603 = vmatpush1.bf16.msra.mxu0 %v572
  %604 = vmatprep.subr.bf16.mxu0 0
  %605 = vmatpush2.bf16.msra.mxu0 0
  %606 = vmatprep.subr.bf16.mxu0 0
  %607 = vmatpush2.bf16.msra.mxu0 0
  %608 = vmatprep.subr.bf16.mxu0 0
  %609 = vmatpush2.bf16.msra.mxu0 0
  %610 = vmatprep.subr.bf16.mxu0 0
  %611 = vmatpush2.bf16.msra.mxu0 0
  %612 = vmatprep.subr.bf16.mxu0 0
  %613 = vmatpush2.bf16.msra.mxu0 0
  %614 = vmatprep.subr.bf16.mxu0 0
  %615 = vmatpush2.bf16.msra.mxu0 0
  %616 = vmatprep.subr.bf16.mxu0 0
  %617 = vmatpush2.bf16.msra.mxu0 0
  %618 = vmatprep.subr.bf16.mxu0 0
  %619 = vmatpush2.bf16.msra.mxu0 0
  %620 = vmatprep.mubr.bf16.mxu0 0
  %621 = vmatmul.mubr.bf16.gmra.mxu0 %v444
  %v622 = vpop.f32.mrf.mxu0
  %v623 = vadd.f32 0.0, %v622
  %v624 = vpop.f32.mrf.mxu0
  %v625 = vpop.f32.mrf.mxu0
  %v626 = vadd.f32 0.0, %v625
  %v627 = vpop.f32.mrf.mxu0
  %628 = vmatprep.mubr.bf16.mxu0 0
  %629 = vmatmul.mubr.bf16.gmra.mxu0 %v445
  %v630 = vpop.f32.mrf.mxu0
  %v631 = vadd.f32 0.0, %v630
  %v632 = vpop.f32.mrf.mxu0
  %v633 = vpop.f32.mrf.mxu0
  %v634 = vadd.f32 0.0, %v633
  %v635 = vpop.f32.mrf.mxu0
  %636 = vmatprep.mubr.bf16.mxu0 0
  %637 = vmatmul.mubr.bf16.gmra.mxu0 %v446
  %v638 = vpop.f32.mrf.mxu0
  %v639 = vadd.f32 0.0, %v638
  %v640 = vpop.f32.mrf.mxu0
  %v641 = vpop.f32.mrf.mxu0
  %v642 = vadd.f32 0.0, %v641
  %v643 = vpop.f32.mrf.mxu0
  %644 = vmatprep.mubr.bf16.mxu0 0
  %645 = vmatmul.mubr.bf16.gmra.mxu0 %v447
  %v646 = vpop.f32.mrf.mxu0
  %v647 = vadd.f32 0.0, %v646
  %v648 = vpop.f32.mrf.mxu0
  %v649 = vpop.f32.mrf.mxu0
  %v650 = vadd.f32 0.0, %v649
  %v651 = vpop.f32.mrf.mxu0
  %652 = vmatprep.mubr.bf16.mxu0 0
  %653 = vmatmul.mubr.bf16.gmra.mxu0 %v448
  %v654 = vpop.f32.mrf.mxu0
  %v655 = vadd.f32 0.0, %v654
  %v656 = vpop.f32.mrf.mxu0
  %v657 = vpop.f32.mrf.mxu0
  %v658 = vadd.f32 0.0, %v657
  %v659 = vpop.f32.mrf.mxu0
  %660 = vmatprep.mubr.bf16.mxu0 0
  %661 = vmatmul.mubr.bf16.gmra.mxu0 %v449
  %v662 = vpop.f32.mrf.mxu0
  %v663 = vadd.f32 0.0, %v662
  %v664 = vpop.f32.mrf.mxu0
  %v665 = vpop.f32.mrf.mxu0
  %v666 = vadd.f32 0.0, %v665
  %v667 = vpop.f32.mrf.mxu0
  %668 = vmatprep.mubr.bf16.mxu0 0
  %669 = vmatmul.mubr.bf16.gmra.mxu0 %v450
  %v670 = vpop.f32.mrf.mxu0
  %v671 = vadd.f32 0.0, %v670
  %v672 = vpop.f32.mrf.mxu0
  %v673 = vpop.f32.mrf.mxu0
  %v674 = vadd.f32 0.0, %v673
  %v675 = vpop.f32.mrf.mxu0
  %676 = vmatprep.mubr.bf16.mxu0 0
  %677 = vmatmul.mubr.bf16.gmra.mxu0 %v451
  %v678 = vpop.f32.mrf.mxu0
  %v679 = vadd.f32 0.0, %v678
  %v680 = vpop.f32.mrf.mxu0
  %v681 = vpop.f32.mrf.mxu0
  %v682 = vadd.f32 0.0, %v681
  %v683 = vpop.f32.mrf.mxu0
  %684 = vdwg.mxu0
  %v685 = vld [vmem:[%s0] sm:$0xf]
  %v686 = vld [vmem:[%s0 + $0x4] sm:$0xf]
  %v687 = vld [vmem:[%s0 + $0x8] sm:$0xf]
  %v688 = vld [vmem:[%s0 + $0xc] sm:$0xf]
  %v689 = vld [vmem:[%s0 + $0x10] sm:$0xf]
  %v690 = vld [vmem:[%s0 + $0x14] sm:$0xf]
  %v691 = vld [vmem:[%s0 + $0x18] sm:$0xf]
  %v692 = vld [vmem:[%s0 + $0x1c] sm:$0xf]
  %v693 = vld [vmem:[%s0 + $0x20] sm:$0xf]
  %v694 = vld [vmem:[%s0 + $0x24] sm:$0xf]
  %v695 = vld [vmem:[%s0 + $0x28] sm:$0xf]
  %v696 = vld [vmem:[%s0 + $0x2c] sm:$0xf]
  %v697 = vld [vmem:[%s0 + $0x30] sm:$0xf]
  %v698 = vld [vmem:[%s0 + $0x34] sm:$0xf]
  %v699 = vld [vmem:[%s0 + $0x38] sm:$0xf]
  %v700 = vld [vmem:[%s0 + $0x3c] sm:$0xf]
  %v701 = vpack.c.bf16 %v626, %v623
  %v702 = vpack.c.bf16 %v634, %v631
  %v703 = vpack.c.bf16 %v642, %v639
  %v704 = vpack.c.bf16 %v650, %v647
  %v705 = vpack.c.bf16 %v658, %v655
  %v706 = vpack.c.bf16 %v666, %v663
  %v707 = vpack.c.bf16 %v674, %v671
  %v708 = vpack.c.bf16 %v682, %v679
  %v709 = vld [vmem:[%s5] sm:$0x1]
  %v711 = vlaneseq
  %v712 = vshrl.u32 %v711, 7
  %v713 = vsub.s32 0, %v712
  %v714 = vrot.slane %v709, %v713
  %v732 = vunpack.c.l.b16 %v685
  %v733 = vunpack.c.l.b16 %v686
  %v734 = vunpack.c.l.b16 %v687
  %v735 = vunpack.c.l.b16 %v688
  %v736 = vunpack.c.l.b16 %v689
  %v737 = vunpack.c.l.b16 %v690
  %v738 = vunpack.c.l.b16 %v691
  %v739 = vunpack.c.l.b16 %v692
  %v740 = vunpack.c.l.b16 %v693
  %v741 = vunpack.c.l.b16 %v694
  %v742 = vunpack.c.l.b16 %v695
  %v743 = vunpack.c.l.b16 %v696
  %v744 = vunpack.c.l.b16 %v697
  %v745 = vunpack.c.l.b16 %v698
  %v746 = vunpack.c.l.b16 %v699
  %v747 = vunpack.c.l.b16 %v700
  %v748 = vpack.c.b16 %v733, %v732
  %v749 = vpack.c.b16 %v735, %v734
  %v750 = vpack.c.b16 %v737, %v736
  %v751 = vpack.c.b16 %v739, %v738
  %v752 = vpack.c.b16 %v741, %v740
  %v753 = vpack.c.b16 %v743, %v742
  %v754 = vpack.c.b16 %v745, %v744
  %v755 = vpack.c.b16 %v747, %v746
  %764 = vmatprep.subr.bf16.mxu0 0
  %765 = vmatpush1.bf16.msra.mxu0 %v708
  %766 = vmatprep.subr.bf16.mxu0 0
  %767 = vmatpush1.bf16.msra.mxu0 %v707
  %768 = vmatprep.subr.bf16.mxu0 0
  %769 = vmatpush1.bf16.msra.mxu0 %v706
  %770 = vmatprep.subr.bf16.mxu0 0
  %771 = vmatpush1.bf16.msra.mxu0 %v705
  %772 = vmatprep.subr.bf16.mxu0 0
  %773 = vmatpush1.bf16.msra.mxu0 %v704
  %774 = vmatprep.subr.bf16.mxu0 0
  %775 = vmatpush1.bf16.msra.mxu0 %v703
  %776 = vmatprep.subr.bf16.mxu0 0
  %777 = vmatpush1.bf16.msra.mxu0 %v702
  %778 = vmatprep.subr.bf16.mxu0 0
  %779 = vmatpush1.bf16.msra.mxu0 %v701
  %780 = vmatprep.subr.bf16.mxu0 0
  %781 = vmatpush2.bf16.msra.mxu0 0
  %782 = vmatprep.subr.bf16.mxu0 0
  %783 = vmatpush2.bf16.msra.mxu0 0
  %784 = vmatprep.subr.bf16.mxu0 0
  %785 = vmatpush2.bf16.msra.mxu0 0
  %786 = vmatprep.subr.bf16.mxu0 0
  %787 = vmatpush2.bf16.msra.mxu0 0
  %788 = vmatprep.subr.bf16.mxu0 0
  %789 = vmatpush2.bf16.msra.mxu0 0
  %790 = vmatprep.subr.bf16.mxu0 0
  %791 = vmatpush2.bf16.msra.mxu0 0
  %792 = vmatprep.subr.bf16.mxu0 0
  %793 = vmatpush2.bf16.msra.mxu0 0
  %794 = vmatprep.subr.bf16.mxu0 0
  %795 = vmatpush2.bf16.msra.mxu0 0
  %796 = vmatprep.mubr.bf16.mxu0 0
  %797 = vmatmul.mubr.bf16.gmra.mxu0 %v748
  %v798 = vpop.f32.mrf.mxu0
  %v799 = vadd.f32 %v714, %v798
  %v800 = vpop.f32.mrf.mxu0
  %v801 = vpop.f32.mrf.mxu0
  %v802 = vadd.f32 %v714, %v801
  %v803 = vpop.f32.mrf.mxu0
  %804 = vmatprep.mubr.bf16.mxu0 0
  %805 = vmatmul.mubr.bf16.gmra.mxu0 %v749
  %v806 = vpop.f32.mrf.mxu0
  %v807 = vadd.f32 %v714, %v806
  %v808 = vpop.f32.mrf.mxu0
  %v809 = vpop.f32.mrf.mxu0
  %v810 = vadd.f32 %v714, %v809
  %v811 = vpop.f32.mrf.mxu0
  %812 = vmatprep.mubr.bf16.mxu0 0
  %813 = vmatmul.mubr.bf16.gmra.mxu0 %v750
  %v814 = vpop.f32.mrf.mxu0
  %v815 = vadd.f32 %v714, %v814
  %v816 = vpop.f32.mrf.mxu0
  %v817 = vpop.f32.mrf.mxu0
  %v818 = vadd.f32 %v714, %v817
  %v819 = vpop.f32.mrf.mxu0
  %820 = vmatprep.mubr.bf16.mxu0 0
  %821 = vmatmul.mubr.bf16.gmra.mxu0 %v751
  %v822 = vpop.f32.mrf.mxu0
  %v823 = vadd.f32 %v714, %v822
  %v824 = vpop.f32.mrf.mxu0
  %v825 = vpop.f32.mrf.mxu0
  %v826 = vadd.f32 %v714, %v825
  %v827 = vpop.f32.mrf.mxu0
  %828 = vmatprep.mubr.bf16.mxu0 0
  %829 = vmatmul.mubr.bf16.gmra.mxu0 %v752
  %v830 = vpop.f32.mrf.mxu0
  %v831 = vadd.f32 %v714, %v830
  %v832 = vpop.f32.mrf.mxu0
  %v833 = vpop.f32.mrf.mxu0
  %v834 = vadd.f32 %v714, %v833
  %v835 = vpop.f32.mrf.mxu0
  %836 = vmatprep.mubr.bf16.mxu0 0
  %837 = vmatmul.mubr.bf16.gmra.mxu0 %v753
  %v838 = vpop.f32.mrf.mxu0
  %v839 = vadd.f32 %v714, %v838
  %v840 = vpop.f32.mrf.mxu0
  %v841 = vpop.f32.mrf.mxu0
  %v842 = vadd.f32 %v714, %v841
  %v843 = vpop.f32.mrf.mxu0
  %844 = vmatprep.mubr.bf16.mxu0 0
  %845 = vmatmul.mubr.bf16.gmra.mxu0 %v754
  %v846 = vpop.f32.mrf.mxu0
  %v847 = vadd.f32 %v714, %v846
  %v848 = vpop.f32.mrf.mxu0
  %v849 = vpop.f32.mrf.mxu0
  %v850 = vadd.f32 %v714, %v849
  %v851 = vpop.f32.mrf.mxu0
  %852 = vmatprep.mubr.bf16.mxu0 0
  %853 = vmatmul.mubr.bf16.gmra.mxu0 %v755
  %v854 = vpop.f32.mrf.mxu0
  %v855 = vadd.f32 %v714, %v854
  %v856 = vpop.f32.mrf.mxu0
  %v857 = vpop.f32.mrf.mxu0
  %v858 = vadd.f32 %v714, %v857
  %v859 = vpop.f32.mrf.mxu0
  %860 = vdwg.mxu0
  %861 = vst [vmem:[%s7] sm:$0xff] %v799
  %862 = vst [vmem:[%s7 + $0x8] sm:$0xff] %v802
  %863 = vst [vmem:[%s7 + $0x10] sm:$0xff] %v807
  %864 = vst [vmem:[%s7 + $0x18] sm:$0xff] %v810
  %865 = vst [vmem:[%s7 + $0x20] sm:$0xff] %v815
  %866 = vst [vmem:[%s7 + $0x28] sm:$0xff] %v818
  %867 = vst [vmem:[%s7 + $0x30] sm:$0xff] %v823
  %868 = vst [vmem:[%s7 + $0x38] sm:$0xff] %v826
  %869 = vst [vmem:[%s7 + $0x40] sm:$0xff] %v831
  %870 = vst [vmem:[%s7 + $0x48] sm:$0xff] %v834
  %871 = vst [vmem:[%s7 + $0x50] sm:$0xff] %v839
  %872 = vst [vmem:[%s7 + $0x58] sm:$0xff] %v842
  %873 = vst [vmem:[%s7 + $0x60] sm:$0xff] %v847
  %874 = vst [vmem:[%s7 + $0x68] sm:$0xff] %v850
  %875 = vst [vmem:[%s7 + $0x70] sm:$0xff] %v855
  %876 = vst [vmem:[%s7 + $0x78] sm:$0xff] %v858
  %v877 = vlaneseq
  %v878 = vand.u32 %v877, 127
  %vm879 = vcmp.lt.s32.totalorder %v878, 8
  %v880 = vsel %vm879, %v799, -1e+30
  %v881 = vsel %vm879, %v802, -1e+30
  %v882 = vsel %vm879, %v807, -1e+30
  %v883 = vsel %vm879, %v810, -1e+30
  %v884 = vsel %vm879, %v815, -1e+30
  %v885 = vsel %vm879, %v818, -1e+30
  %v886 = vsel %vm879, %v823, -1e+30
  %v887 = vsel %vm879, %v826, -1e+30
  %v888 = vsel %vm879, %v831, -1e+30
  %v889 = vsel %vm879, %v834, -1e+30
  %v890 = vsel %vm879, %v839, -1e+30
  %v891 = vsel %vm879, %v842, -1e+30
  %v892 = vsel %vm879, %v847, -1e+30
  %v893 = vsel %vm879, %v850, -1e+30
  %v894 = vsel %vm879, %v855, -1e+30
  %v895 = vsel %vm879, %v858, -1e+30
  %896 = vmax.xlane.f32.xlu0 %v880
  %v897 = vpop.xlane.xlu0 %896
  %898 = vmax.xlane.f32.xlu0 %v881
  %v899 = vpop.xlane.xlu0 %898
  %900 = vmax.xlane.f32.xlu0 %v882
  %v901 = vpop.xlane.xlu0 %900
  %902 = vmax.xlane.f32.xlu0 %v883
  %v903 = vpop.xlane.xlu0 %902
  %904 = vmax.xlane.f32.xlu0 %v884
  %v905 = vpop.xlane.xlu0 %904
  %906 = vmax.xlane.f32.xlu0 %v885
  %v907 = vpop.xlane.xlu0 %906
  %908 = vmax.xlane.f32.xlu0 %v886
  %v909 = vpop.xlane.xlu0 %908
  %910 = vmax.xlane.f32.xlu0 %v887
  %v911 = vpop.xlane.xlu0 %910
  %912 = vmax.xlane.f32.xlu0 %v888
  %v913 = vpop.xlane.xlu0 %912
  %914 = vmax.xlane.f32.xlu0 %v889
  %v915 = vpop.xlane.xlu0 %914
  %916 = vmax.xlane.f32.xlu0 %v890
  %v917 = vpop.xlane.xlu0 %916
  %918 = vmax.xlane.f32.xlu0 %v891
  %v919 = vpop.xlane.xlu0 %918
  %920 = vmax.xlane.f32.xlu0 %v892
  %v921 = vpop.xlane.xlu0 %920
  %922 = vmax.xlane.f32.xlu0 %v893
  %v923 = vpop.xlane.xlu0 %922
  %924 = vmax.xlane.f32.xlu0 %v894
  %v925 = vpop.xlane.xlu0 %924
  %926 = vmax.xlane.f32.xlu0 %v895
  %v927 = vpop.xlane.xlu0 %926
  %v928 = vsub.f32 %v880, %v897
  %v929 = vsub.f32 %v881, %v899
  %v930 = vsub.f32 %v882, %v901
  %v931 = vsub.f32 %v883, %v903
  %v932 = vsub.f32 %v884, %v905
  %v933 = vsub.f32 %v885, %v907
  %v934 = vsub.f32 %v886, %v909
  %v935 = vsub.f32 %v887, %v911
  %v936 = vsub.f32 %v888, %v913
  %v937 = vsub.f32 %v889, %v915
  %v938 = vsub.f32 %v890, %v917
  %v939 = vsub.f32 %v891, %v919
  %v940 = vsub.f32 %v892, %v921
  %v941 = vsub.f32 %v893, %v923
  %v942 = vsub.f32 %v894, %v925
  %v943 = vsub.f32 %v895, %v927
  %v944 = vmul.f32 %v928, 1.442695
  %v945 = vpow.pop %v944
  %v946 = vmul.f32 %v929, 1.442695
  %v947 = vpow.pop %v946
  %v948 = vmul.f32 %v930, 1.442695
  %v949 = vpow.pop %v948
  %v950 = vmul.f32 %v931, 1.442695
  %v951 = vpow.pop %v950
  %v952 = vmul.f32 %v932, 1.442695
  %v953 = vpow.pop %v952
  %v954 = vmul.f32 %v933, 1.442695
  %v955 = vpow.pop %v954
  %v956 = vmul.f32 %v934, 1.442695
  %v957 = vpow.pop %v956
  %v958 = vmul.f32 %v935, 1.442695
  %v959 = vpow.pop %v958
  %v960 = vmul.f32 %v936, 1.442695
  %v961 = vpow.pop %v960
  %v962 = vmul.f32 %v937, 1.442695
  %v963 = vpow.pop %v962
  %v964 = vmul.f32 %v938, 1.442695
  %v965 = vpow.pop %v964
  %v966 = vmul.f32 %v939, 1.442695
  %v967 = vpow.pop %v966
  %v968 = vmul.f32 %v940, 1.442695
  %v969 = vpow.pop %v968
  %v970 = vmul.f32 %v941, 1.442695
  %v971 = vpow.pop %v970
  %v972 = vmul.f32 %v942, 1.442695
  %v973 = vpow.pop %v972
  %v974 = vmul.f32 %v943, 1.442695
  %v975 = vpow.pop %v974
  %976 = vadd.xlane.f32.xlu0 %v945
  %v977 = vpop.xlane.xlu0 %976
  %978 = vadd.xlane.f32.xlu0 %v947
  %v979 = vpop.xlane.xlu0 %978
  %980 = vadd.xlane.f32.xlu0 %v949
  %v981 = vpop.xlane.xlu0 %980
  %982 = vadd.xlane.f32.xlu0 %v951
  %v983 = vpop.xlane.xlu0 %982
  %984 = vadd.xlane.f32.xlu0 %v953
  %v985 = vpop.xlane.xlu0 %984
  %986 = vadd.xlane.f32.xlu0 %v955
  %v987 = vpop.xlane.xlu0 %986
  %988 = vadd.xlane.f32.xlu0 %v957
  %v989 = vpop.xlane.xlu0 %988
  %990 = vadd.xlane.f32.xlu0 %v959
  %v991 = vpop.xlane.xlu0 %990
  %992 = vadd.xlane.f32.xlu0 %v961
  %v993 = vpop.xlane.xlu0 %992
  %994 = vadd.xlane.f32.xlu0 %v963
  %v995 = vpop.xlane.xlu0 %994
  %996 = vadd.xlane.f32.xlu0 %v965
  %v997 = vpop.xlane.xlu0 %996
  %998 = vadd.xlane.f32.xlu0 %v967
  %v999 = vpop.xlane.xlu0 %998
  %1000 = vadd.xlane.f32.xlu0 %v969
  %v1001 = vpop.xlane.xlu0 %1000
  %1002 = vadd.xlane.f32.xlu0 %v971
  %v1003 = vpop.xlane.xlu0 %1002
  %1004 = vadd.xlane.f32.xlu0 %v973
  %v1005 = vpop.xlane.xlu0 %1004
  %1006 = vadd.xlane.f32.xlu0 %v975
  %v1007 = vpop.xlane.xlu0 %1006
  %v1008 = vlog2.pop %v977
  %v1009 = vmul.f32 %v1008, 0.6931472
  %v1010 = vlog2.pop %v979
  %v1011 = vmul.f32 %v1010, 0.6931472
  %v1012 = vlog2.pop %v981
  %v1013 = vmul.f32 %v1012, 0.6931472
  %v1014 = vlog2.pop %v983
  %v1015 = vmul.f32 %v1014, 0.6931472
  %v1016 = vlog2.pop %v985
  %v1017 = vmul.f32 %v1016, 0.6931472
  %v1018 = vlog2.pop %v987
  %v1019 = vmul.f32 %v1018, 0.6931472
  %v1020 = vlog2.pop %v989
  %v1021 = vmul.f32 %v1020, 0.6931472
  %v1022 = vlog2.pop %v991
  %v1023 = vmul.f32 %v1022, 0.6931472
  %v1024 = vlog2.pop %v993
  %v1025 = vmul.f32 %v1024, 0.6931472
  %v1026 = vlog2.pop %v995
  %v1027 = vmul.f32 %v1026, 0.6931472
  %v1028 = vlog2.pop %v997
  %v1029 = vmul.f32 %v1028, 0.6931472
  %v1030 = vlog2.pop %v999
  %v1031 = vmul.f32 %v1030, 0.6931472
  %v1032 = vlog2.pop %v1001
  %v1033 = vmul.f32 %v1032, 0.6931472
  %v1034 = vlog2.pop %v1003
  %v1035 = vmul.f32 %v1034, 0.6931472
  %v1036 = vlog2.pop %v1005
  %v1037 = vmul.f32 %v1036, 0.6931472
  %v1038 = vlog2.pop %v1007
  %v1039 = vmul.f32 %v1038, 0.6931472
  %v1040 = vsub.f32 %v928, %v1009
  %v1041 = vsub.f32 %v929, %v1011
  %v1042 = vsub.f32 %v930, %v1013
  %v1043 = vsub.f32 %v931, %v1015
  %v1044 = vsub.f32 %v932, %v1017
  %v1045 = vsub.f32 %v933, %v1019
  %v1046 = vsub.f32 %v934, %v1021
  %v1047 = vsub.f32 %v935, %v1023
  %v1048 = vsub.f32 %v936, %v1025
  %v1049 = vsub.f32 %v937, %v1027
  %v1050 = vsub.f32 %v938, %v1029
  %v1051 = vsub.f32 %v939, %v1031
  %v1052 = vsub.f32 %v940, %v1033
  %v1053 = vsub.f32 %v941, %v1035
  %v1054 = vsub.f32 %v942, %v1037
  %v1055 = vsub.f32 %v943, %v1039
  %1056 = vst [vmem:[%s8] sm:$0xff] %v1040
  %1057 = vst [vmem:[%s8 + $0x8] sm:$0xff] %v1041
  %1058 = vst [vmem:[%s8 + $0x10] sm:$0xff] %v1042
  %1059 = vst [vmem:[%s8 + $0x18] sm:$0xff] %v1043
  %1060 = vst [vmem:[%s8 + $0x20] sm:$0xff] %v1044
  %1061 = vst [vmem:[%s8 + $0x28] sm:$0xff] %v1045
  %1062 = vst [vmem:[%s8 + $0x30] sm:$0xff] %v1046
  %1063 = vst [vmem:[%s8 + $0x38] sm:$0xff] %v1047
  %1064 = vst [vmem:[%s8 + $0x40] sm:$0xff] %v1048
  %1065 = vst [vmem:[%s8 + $0x48] sm:$0xff] %v1049
  %1066 = vst [vmem:[%s8 + $0x50] sm:$0xff] %v1050
  %1067 = vst [vmem:[%s8 + $0x58] sm:$0xff] %v1051
  %1068 = vst [vmem:[%s8 + $0x60] sm:$0xff] %v1052
  %1069 = vst [vmem:[%s8 + $0x68] sm:$0xff] %v1053
  %1070 = vst [vmem:[%s8 + $0x70] sm:$0xff] %v1054
  %1071 = vst [vmem:[%s8 + $0x78] sm:$0xff] %v1055
  // Predicated region
  $region26: #{gcn_forward.1} parent=0 // pred_check
    _
  $region27: #{gcn_forward.1} parent=0 // pred_check_branch
    %1073 = sbr.rel (0) target = $region29
  $region28: #{gcn_forward.1} parent=0 // pred_region
    _
  $region29: #{gcn_forward.1} parent=0 // pred_fallthru
    _
  // Predicated region
  $region30: #{gcn_forward.1} parent=0 // pred_check
    _
  $region31: #{gcn_forward.1} parent=0 // pred_check_branch
    %1075 = sbr.rel (0) target = $region33
  $region32: #{gcn_forward.1} parent=0 // pred_region
    _
  $region33: #{gcn_forward.1} parent=0 // pred_fallthru
    _
  // Predicated region
  $region34: #{gcn_forward.1} parent=0 // pred_check
    _
  $region35: #{gcn_forward.1} parent=0 // pred_check_branch
    %1077 = sbr.rel (0) target = $region37
  $region36: #{gcn_forward.1} parent=0 // pred_region
    _
  $region37: #{gcn_forward.1} parent=0 // pred_fallthru
    _
  // Predicated region
  $region38: #{gcn_forward.1} parent=0 // pred_check
    _
  $region39: #{gcn_forward.1} parent=0 // pred_check_branch
    %1079 = sbr.rel (0) target = $region41
  $region40: #{gcn_forward.1} parent=0 // pred_region
    _
  $region41: #{gcn_forward.1} parent=0 // pred_fallthru
    _
  // Predicated region
  $region42: #{gcn_forward.1} parent=0 // pred_check
    _
  $region43: #{gcn_forward.1} parent=0 // pred_check_branch
    %1081 = sbr.rel (0) target = $region45
  $region44: #{gcn_forward.1} parent=0 // pred_region
    _
  $region45: #{gcn_forward.1} parent=0 // pred_fallthru
    _
  // Predicated region
  $region46: #{gcn_forward.1} parent=0 // pred_check
    _
  $region47: #{gcn_forward.1} parent=0 // pred_check_branch
    %1083 = sbr.rel (0) target = $region49
  $region48: #{gcn_forward.1} parent=0 // pred_region
    _
  $region49: #{gcn_forward.1} parent=0 // pred_fallthru
    _

</llo_original>
